<compile_context>
chip_gen: v7x
topology: tpu7x:2x2x1
jax: 0.10.0
libtpu: 0.0.40
codegen_flags: <defaults>
</compile_context>

<pallas_src>
import jax
import jax.numpy as jnp
from jax.experimental import pallas as pl
from jax.experimental.pallas import tpu as pltpu

SIZE = 1  # matches the module-level `size` in the PyTorch script

# Below this total traffic, skip Pallas and let XLA do the concat.
_SMALL_BYPASS_BYTES = 2 * 1024 * 1024
# Above this, make sure the grid has >=2 parallel steps (v7x: 2 TCs/chip).
_MULTI_STEP_BYTES = 4 * 1024 * 1024


def _vmem_budget_bytes():
    """Generation-aware per-call VMEM budget (covers double buffering)."""
    try:
        info = pltpu.get_tpu_info()
        phys = int(getattr(info, "vmem_capacity_bytes", 64 * 1024 * 1024))
    except Exception:
        phys = 64 * 1024 * 1024  # conservative (v7x per-TC VMEM)
    # Stay well under the scoped default on every generation
    # (16 MiB v5e, 32 MiB v6e/v7x) while accounting for double buffering.
    budget = min(12 * 1024 * 1024, phys // 5)
    vmem_limit = min(phys // 2, max(16 * 1024 * 1024, 2 * budget))
    return budget, vmem_limit


def cat_slice_cat(x, size=SIZE, force_pallas=False):
    """Equivalent of Model.forward: concat x with its first `size` channels."""
    N, C, H, W = x.shape
    assert 0 < size <= C
    C_out = C + size
    HW = H * W
    itemsize = jnp.dtype(x.dtype).itemsize
    total_bytes = (N * C + N * C_out) * HW * itemsize

    # --- Tiny-input bypass: Pallas launch overhead would dominate. ----------
    if total_bytes <= _SMALL_BYPASS_BYTES and not force_pallas:
        return jnp.concatenate([x, x[:, :size, :, :]], axis=1)

    budget, vmem_limit = _vmem_budget_bytes()

    # Lane-dense view: last dim is H*W (row-major reshape, no relayout copy).
    x3 = x.reshape(N, C, HW)

    # --- Block sizing (trace-time Python) -----------------------------------
    # in block  : (nb, C,     hw_tile)
    # out block : (nb, C_out, hw_tile)
    # Pallas double-buffers both -> factor of 2 in the budget.
    def fits(nb_, hw_):
        return 2 * nb_ * (C + C_out) * hw_ * itemsize <= budget

    if fits(1, HW):
        hw_tile = HW
    else:
        # Largest multiple of 128 (<= HW) that fits; trailing partial block
        # handled by the cdiv grid below.
        hw_tile = 128
        for k in range(HW // 128, 0, -1):
            if fits(1, k * 128):
                hw_tile = k * 128
                break

    nb = 1
    for cand in range(N, 0, -1):
        if fits(cand, hw_tile):
            nb = cand
            break

    # v7x megacore: keep >=2 parallel grid steps for large mem-bound copies.
    if total_bytes >= _MULTI_STEP_BYTES and pl.cdiv(N, nb) * pl.cdiv(HW, hw_tile) < 2:
        if N >= 2:
            nb = max(1, (N + 1) // 2)
        elif hw_tile > 128:
            hw_tile = max(128, ((hw_tile // 2 + 127) // 128) * 128)

    grid = (pl.cdiv(N, nb), pl.cdiv(HW, hw_tile))

    # --- Kernel --------------------------------------------------------------
    def _cat_kernel(x_ref, o_ref):
        # x_ref: (nb, C, hw_tile), o_ref: (nb, C_out, hw_tile) in VMEM.
        # Two static-sliced stores realize the concat; the duplicated channels
        # are reused straight from the already-resident input block.
        o_ref[:, :C, :] = x_ref[...]
        o_ref[:, C:, :] = x_ref[:, :size, :]

    out3 = pl.pallas_call(
        _cat_kernel,
        out_shape=jax.ShapeDtypeStruct((N, C_out, HW), x.dtype),
        grid=grid,
        in_specs=[pl.BlockSpec((nb, C, hw_tile), lambda i, j: (i, 0, j))],
        out_specs=pl.BlockSpec((nb, C_out, hw_tile), lambda i, j: (i, 0, j)),
        compiler_params=pltpu.CompilerParams(
            dimension_semantics=("parallel", "parallel"),
            vmem_limit_bytes=vmem_limit,
        ),
        cost_estimate=pl.CostEstimate(
            flops=0, transcendentals=0, bytes_accessed=total_bytes
        ),
    )(x3)

    return out3.reshape(N, C_out, H, W)


if __name__ == "__main__":
    key = jax.random.PRNGKey(0)
    x = jax.random.normal(key, (2, 4, 16, 16), dtype=jnp.float32)

    # Reference semantics (plain JAX).
    ref = jnp.concatenate([x, x[:, 0:SIZE, :, :]], axis=1)

    # Exercise the Pallas kernel path explicitly (the test shape would
    # otherwise hit the tiny-input bypass).
    out_pallas = cat_slice_cat(x, force_pallas=True)
    # Default path (bypass for tiny inputs) must agree as well.
    out_default = cat_slice_cat(x)
    out_pallas, out_default = jax.block_until_ready((out_pallas, out_default))

    assert out_pallas.shape == (2, 4 + SIZE, 16, 16), out_pallas.shape
    assert out_pallas.dtype == x.dtype
    assert bool(jnp.array_equal(out_pallas, ref))
    assert bool(jnp.array_equal(out_default, ref))

    print("KERNEL_OK")
</pallas_src>

<mosaic_0001>
module attributes {stable_mosaic.version = 11 : i64} {
  func.func @_cat_kernel(%arg0: i32, %arg1: i32, %arg2: memref<2x4x256xf32, #tpu.memory_space<vmem>>, %arg3: memref<2x5x256xf32, #tpu.memory_space<vmem>>) attributes {dimension_semantics = [#tpu.dimension_semantics<parallel>, #tpu.dimension_semantics<parallel>], iteration_bounds = array<i64: 1, 1>, scalar_prefetch = 0 : i64, scratch_operands = 0 : i64, tpu.core_type = #tpu.core_type<tc>, window_params = [{transform_indices = @transform_0, window_bounds = array<i64: 2, 4, 256>}, {transform_indices = @transform_1, window_bounds = array<i64: 2, 5, 256>}]} {
    %c0 = arith.constant 0 : index
    %c0_0 = arith.constant 0 : index
    %c0_1 = arith.constant 0 : index
    %0 = vector.load %arg2[%c0, %c0_0, %c0_1] : memref<2x4x256xf32, #tpu.memory_space<vmem>>, vector<2x4x256xf32>
    %c0_2 = arith.constant 0 : index
    %c0_3 = arith.constant 0 : index
    %c0_4 = arith.constant 0 : index
    %1 = vector.load %arg3[%c0_2, %c0_3, %c0_4] : memref<2x5x256xf32, #tpu.memory_space<vmem>>, vector<2x4x256xf32>
    tpu.vector_store %arg3[%c0_2, %c0_3, %c0_4], %0 {strides = array<i32>} : memref<2x5x256xf32, #tpu.memory_space<vmem>>, vector<2x4x256xf32>,
    %c0_5 = arith.constant 0 : index
    %c0_6 = arith.constant 0 : index
    %c0_7 = arith.constant 0 : index
    %2 = vector.load %arg2[%c0_5, %c0_6, %c0_7] : memref<2x4x256xf32, #tpu.memory_space<vmem>>, vector<2x1x256xf32>
    %c0_8 = arith.constant 0 : index
    %c4 = arith.constant 4 : index
    %c0_9 = arith.constant 0 : index
    %3 = vector.load %arg3[%c0_8, %c4, %c0_9] : memref<2x5x256xf32, #tpu.memory_space<vmem>>, vector<2x1x256xf32>
    tpu.vector_store %arg3[%c0_8, %c4, %c0_9], %2 {strides = array<i32>} : memref<2x5x256xf32, #tpu.memory_space<vmem>>, vector<2x1x256xf32>,
    return
  }
  func.func @transform_0(%arg0: i32, %arg1: i32) -> (i32, i32, i32) {
    %c0_i32 = arith.constant 0 : i32
    %c0_i32_0 = arith.constant 0 : i32
    return %arg0, %c0_i32, %arg1 : i32, i32, i32
  }
  func.func @transform_1(%arg0: i32, %arg1: i32) -> (i32, i32, i32) {
    %c0_i32 = arith.constant 0 : i32
    %c0_i32_0 = arith.constant 0 : i32
    return %arg0, %c0_i32, %arg1 : i32, i32, i32
  }
}

</mosaic_0001>

<llo_original>
// kernel: tpu_custom_call.1
$region0: #{tpu_custom_call.1}
  #allocation0 [shape = 'u32[]', space=smem, size = 0x4, offset = 0x4, fixed_abs, tag = 'smem constant byte address 0x4 - core index']
  #allocation1 [shape = 'u32[144,128]{1,0:T(1,128)}', space=vmem, size = 0x12000, scoped, tag = 'internal scratch']
  %s0 = inlined_call_operand.hbm [shape: f32[2,4,256], index: 0, kind: input, shape index: {}]
  %s1 = inlined_call_operand.vmem [shape: f32[2,5,256], index: 1, kind: output, shape index: {}]
  %s2 = sld [smem:[#allocation0]]
  $region18: #{tpu_custom_call.1} parent=0
    _
  %s4 = ssub.s32 1, %s2
  %s5 = scalar_select 0, %s4, %s2
  $region1: #{tpu_custom_call.1} parent=0
    #allocation2 [shape = 'u8[8192]{0}', space=vmem, size = 0x2000, scoped, tag = 'input window, operand 0, single buffered']
    #allocation3 [shape = 's32[1]{0}', space=sflag, size = 0x4, scoped, tag = 'scoped memory for tpu_custom_call.1']
    %6 = vsyncpa [#allocation3], 0
    // Predicated region
    $region2: #{tpu_custom_call.1} parent=1 // pred_check
      _
    $region3: #{tpu_custom_call.1} parent=1 // pred_check_branch
      %8 = sbr.rel (0) target = $region5
    $region4: #{tpu_custom_call.1} parent=1 // pred_region
      %s10 = ssub.s32 256, 256
      %11 = vsyncadd [#allocation3], %s10
      %s12 = sshll.u32 [#allocation2], 4
      %s13 = int_to_ptr.vmem [resolvable:$true] %s12
      %18 = dma.hbm_to_vmem [thread:$0]  %s0, 256, %s13, [#allocation3], 128, 128, 8
    $region5: #{tpu_custom_call.1} parent=1 // pred_fallthru
      _
    // Predicated region
    $region6: #{tpu_custom_call.1} parent=1 // pred_check
      _
    $region7: #{tpu_custom_call.1} parent=1 // pred_check_branch
      %20 = sbr.rel (0) target = $region9
    $region8: #{tpu_custom_call.1} parent=1 // pred_region
      %21 = dma.done [#allocation3], 256
    $region9: #{tpu_custom_call.1} parent=1 // pred_fallthru
      _
    %v22 = vld [vmem:[#allocation2] sm:$0xff]
    %v23 = vld [vmem:[#allocation2 + $0x8] sm:$0xff]
    %v26 = vcombine.high %v22, %v22
    %v27 = vcombine.high %v23, %v23
    %30 = vst [vmem:[%s1] sm:$0xf] %v22
    %31 = vst [vmem:[%s1 + $0x8] sm:$0xf] %v26
    %32 = vst [vmem:[%s1 + $0x10] sm:$0xf] %v23
    %33 = vst [vmem:[%s1 + $0x18] sm:$0xf] %v27
    %v34 = vld [vmem:[#allocation2] ss:$4 sm:$0x3]
    %s35 = scalar_lea.vmem [#allocation2], 8
    %v36 = vld [vmem:[%s35] ss:$4 sm:$0x3]
    %v37 = vlaneseq
    %vm38 = vcmp.ge.s32.totalorder %v37, 0
    %vm39 = vcmp.lt.s32.totalorder %v37, 256
    %vm40 = vmand %vm38, %vm39
    %s41 = scalar_lea.vmem %s1, 4
    %42 = vst.msk [vmem:[%s41] ss:$8 sm:$0x3] %vm40, %v34
    %43 = vst.msk [vmem:[%s41] ss:$8 sm:$0x0] %vm40, %v34
    %s44 = scalar_lea.vmem %s1, 20
    %45 = vst.msk [vmem:[%s44] ss:$8 sm:$0x3] %vm40, %v36
    %46 = vst.msk [vmem:[%s44] ss:$8 sm:$0x0] %vm40, %v36
    // Predicated region
    $region10: #{tpu_custom_call.1} parent=1 // pred_check
      _
    $region11: #{tpu_custom_call.1} parent=1 // pred_check_branch
      %48 = sbr.rel (0) target = $region13
    $region12: #{tpu_custom_call.1} parent=1 // pred_region
      _
    $region13: #{tpu_custom_call.1} parent=1 // pred_fallthru
      _
    // Predicated region
    $region14: #{tpu_custom_call.1} parent=1 // pred_check
      _
    $region15: #{tpu_custom_call.1} parent=1 // pred_check_branch
      %50 = sbr.rel (0) target = $region17
    $region16: #{tpu_custom_call.1} parent=1 // pred_region
      _
    $region17: #{tpu_custom_call.1} parent=1 // pred_fallthru
      _
    %51 = vsyncpa [#allocation3], 1

</llo_original>
